<compile_context>
chip_gen: v6e
topology: v6e:2x2x1
jax: 0.10.0
libtpu: 0.0.40
codegen_flags: <defaults>
</compile_context>

<pallas_src>
import functools

import jax
import jax.numpy as jnp
from jax.experimental import pallas as pl
from jax.experimental.pallas import tpu as pltpu


# ---------------------------------------------------------------------------
# Tiling helpers
# ---------------------------------------------------------------------------
def _round_up(x, m):
    return (x + m - 1) // m * m


def _choose_block_b(batch, embed_dim, vmem_budget_bytes=12 << 20):
    """Rows per tile: multiple of 128 (lane-dense score block), VMEM-bounded."""
    per_row = 3 * 2 * embed_dim * 4          # 3 f32 inputs, double-buffered
    tb = min(1024, max(128, vmem_budget_bytes // per_row))
    tb = (tb // 128) * 128                   # lane granularity
    tb = min(tb, _round_up(batch, 128))      # don't exceed (padded) batch
    return max(128, tb)


# ---------------------------------------------------------------------------
# Fused kernel: pos/neg scores + per-tile BCE-with-logits partial sums
# ---------------------------------------------------------------------------
def _npair_fused_kernel(hedge_ref, pos_ref, neg_ref, scores_ref, lpart_ref, *,
                        batch):
    i = pl.program_id(0)
    tb = hedge_ref.shape[0]

    h = hedge_ref[...].astype(jnp.float32)                                  # (TB, D)
    ps = jnp.sum(pos_ref[...].astype(jnp.float32) * h, axis=-1, keepdims=True)  # (TB,1)
    ns = jnp.sum(neg_ref[...].astype(jnp.float32) * h, axis=-1, keepdims=True)  # (TB,1)

    # Mask rows past the true batch (boundary blocks read unspecified data).
    row = jax.lax.broadcasted_iota(jnp.int32, (tb, 1), 0) + i * tb
    valid = row < batch
    ps = jnp.where(valid, ps, 0.0)
    ns = jnp.where(valid, ns, 0.0)

    # Lane-dense score block: build a (TB,128) slab with pos in lane 0 and neg
    # in lane 1, do one fully aligned XLU transpose, keep rows 0..1 -> (2, TB)
    # with the batch on lanes (unmasked vst on the store path).
    lane = jax.lax.broadcasted_iota(jnp.int32, (tb, 128), 1)
    slab = jnp.where(lane == 0, ps, jnp.where(lane == 1, ns, 0.0))          # (TB,128)
    scores_ref[...] = slab.T[0:2, :]                                        # (2, TB)

    # BCEWithLogits numerator for this tile:
    #   bce(x, 1) = softplus(-x), bce(x, 0) = softplus(x)  (stable logaddexp).
    per_row_loss = jnp.logaddexp(0.0, -ps) + jnp.logaddexp(0.0, ns)         # (TB,1)
    part = jnp.sum(jnp.where(valid, per_row_loss, 0.0))
    lpart_ref[...] = jnp.broadcast_to(part, lpart_ref.shape)                # (1,8,128)


# ---------------------------------------------------------------------------
# Wrappers
# ---------------------------------------------------------------------------
def npair_forward_and_loss(hedge_out, pos_ent_emb, neg_ent_emb, *, block_b=None):
    """Fused NPairBase.forward + NPairBase.loss (PairLoss).

    Returns (pos_score[B], neg_score[B], scalar BCE-with-logits loss).
    """
    B, D = hedge_out.shape
    tb = block_b if block_b is not None else _choose_block_b(B, D)
    g = pl.cdiv(B, tb)

    in_spec = pl.BlockSpec((tb, D), lambda i: (i, 0))
    scores, lparts = pl.pallas_call(
        functools.partial(_npair_fused_kernel, batch=B),
        grid=(g,),
        in_specs=[in_spec, in_spec, in_spec],
        out_specs=(pl.BlockSpec((2, tb), lambda i: (0, i)),        # lane-dense scores
                   pl.BlockSpec((1, 8, 128), lambda i: (i, 0, 0))),  # per-tile loss partials
        out_shape=(jax.ShapeDtypeStruct((2, B), jnp.float32),
                   jax.ShapeDtypeStruct((g, 8, 128), jnp.float32)),
        compiler_params=pltpu.CompilerParams(
            dimension_semantics=("parallel",)),
    )(hedge_out, pos_ent_emb, neg_ent_emb)

    pos_score = scores[0]
    neg_score = scores[1]
    # G per-tile partials -> scalar loss. Trivial reduce; kept outside the
    # kernel so the batch grid axis stays parallel-safe (no cross-step accum).
    loss = jnp.sum(lparts[:, 0, 0]) / jnp.float32(2 * B)
    return pos_score, neg_score, loss


def npair_forward(hedge_out, pos_ent_emb, neg_ent_emb):
    """NPairBase.forward: (pos_score, neg_score)."""
    p, n, _ = npair_forward_and_loss(hedge_out, pos_ent_emb, neg_ent_emb)
    return p, n


# ---------------------------------------------------------------------------
# Parameter init (NPairBase.__init__ shapes, deterministic) + reference
# ---------------------------------------------------------------------------
def get_param(key, shape):
    # xavier-normal-like init (get_param(..., norm=False) in the reference code)
    fan_in, fan_out = shape[0], shape[-1]
    std = (2.0 / (fan_in + fan_out)) ** 0.5
    return jax.random.normal(key, shape, jnp.float32) * std


def _reference(hedge, pos, neg):
    rp = jnp.sum(pos * hedge, axis=-1)
    rn = jnp.sum(neg * hedge, axis=-1)
    loss = (jnp.sum(jax.nn.softplus(-rp)) + jnp.sum(jax.nn.softplus(rn))) / (2 * rp.shape[0])
    return rp, rn, loss


if __name__ == "__main__":
    key = jax.random.PRNGKey(0)
    k1, k2, k3, k4, k5 = jax.random.split(key, 5)

    # small, module-consistent hyperparameters
    B = 2
    embed_dim = 32
    K_hop = 2
    num_rel = 4

    # NPairBase parameters (deterministic; unused by the fused kernel because
    # out_model consumes them — see TODO below).
    dis_embedding = get_param(k1, (2 * K_hop + 3, embed_dim))
    rel_embedding = get_param(k2, (num_rel, embed_dim))

    # TODO(synk): self.out_model (HART/QBLP/SubgTrans) is not defined in the
    # provided source; its outputs (hedge_out, pos_ent_emb, neg_ent_emb) are
    # taken directly as inputs to the fused Pallas kernel.
    hedge_out = jax.random.normal(k3, (B, embed_dim), jnp.float32)
    pos_ent_emb = jax.random.normal(k4, (B, embed_dim), jnp.float32)
    neg_ent_emb = jax.random.normal(k5, (B, embed_dim), jnp.float32)

    pos_score, neg_score, loss = npair_forward_and_loss(
        hedge_out, pos_ent_emb, neg_ent_emb)
    jax.block_until_ready((pos_score, neg_score, loss))

    rp, rn, rl = _reference(hedge_out, pos_ent_emb, neg_ent_emb)
    assert jnp.allclose(pos_score, rp, atol=1e-5)
    assert jnp.allclose(neg_score, rn, atol=1e-5)
    assert jnp.allclose(loss, rl, atol=1e-5)

    # Second check: multi-tile grid + ragged last tile (B not a tile multiple).
    B2 = 300
    kk = jax.random.split(jax.random.PRNGKey(1), 3)
    h2 = jax.random.normal(kk[0], (B2, embed_dim), jnp.float32)
    p2 = jax.random.normal(kk[1], (B2, embed_dim), jnp.float32)
    n2 = jax.random.normal(kk[2], (B2, embed_dim), jnp.float32)
    ps2, ns2, l2 = npair_forward_and_loss(h2, p2, n2, block_b=128)
    jax.block_until_ready((ps2, ns2, l2))
    rp2, rn2, rl2 = _reference(h2, p2, n2)
    assert jnp.allclose(ps2, rp2, atol=1e-4)
    assert jnp.allclose(ns2, rn2, atol=1e-4)
    assert jnp.allclose(l2, rl2, atol=1e-4)

    print("KERNEL_OK")
</pallas_src>

<mosaic_0001>
module attributes {stable_mosaic.version = 11 : i64} {
  func.func @_npair_fused_kernel(%arg0: i32, %arg1: memref<128x32xf32, #tpu.memory_space<vmem>>, %arg2: memref<128x32xf32, #tpu.memory_space<vmem>>, %arg3: memref<128x32xf32, #tpu.memory_space<vmem>>, %arg4: memref<2x128xf32, #tpu.memory_space<vmem>>, %arg5: memref<1x8x128xf32, #tpu.memory_space<vmem>>) attributes {dimension_semantics = [#tpu.dimension_semantics<parallel>], iteration_bounds = array<i64: 1>, scalar_prefetch = 0 : i64, scratch_operands = 0 : i64, tpu.core_type = #tpu.core_type<tc>, window_params = [{transform_indices = @transform_0, window_bounds = array<i64: 128, 32>}, {transform_indices = @transform_1, window_bounds = array<i64: 128, 32>}, {transform_indices = @transform_2, window_bounds = array<i64: 128, 32>}, {transform_indices = @transform_3, window_bounds = array<i64: 2, 128>}, {transform_indices = @transform_4, window_bounds = array<i64: 1, 8, 128>}]} {
    %c0 = arith.constant 0 : index
    %c0_0 = arith.constant 0 : index
    %0 = vector.load %arg1[%c0, %c0_0] : memref<128x32xf32, #tpu.memory_space<vmem>>, vector<128x32xf32>
    %c0_1 = arith.constant 0 : index
    %c0_2 = arith.constant 0 : index
    %1 = vector.load %arg2[%c0_1, %c0_2] : memref<128x32xf32, #tpu.memory_space<vmem>>, vector<128x32xf32>
    %2 = arith.mulf %1, %0 : vector<128x32xf32>
    %cst = arith.constant dense<0.000000e+00> : vector<128xf32>
    %3 = vector.multi_reduction <add>, %2, %cst [1] : vector<128x32xf32> to vector<128xf32>
    %4 = vector.shape_cast %3 : vector<128xf32> to vector<128x1xf32>
    %c0_3 = arith.constant 0 : index
    %c0_4 = arith.constant 0 : index
    %5 = vector.load %arg3[%c0_3, %c0_4] : memref<128x32xf32, #tpu.memory_space<vmem>>, vector<128x32xf32>
    %6 = arith.mulf %5, %0 : vector<128x32xf32>
    %cst_5 = arith.constant dense<0.000000e+00> : vector<128xf32>
    %7 = vector.multi_reduction <add>, %6, %cst_5 [1] : vector<128x32xf32> to vector<128xf32>
    %8 = vector.shape_cast %7 : vector<128xf32> to vector<128x1xf32>
    %9 = tpu.iota {dimensions = array<i32: 0>} : vector<128x1xi32>
    %c128_i32 = arith.constant 128 : i32
    %10 = arith.muli %arg0, %c128_i32 : i32
    %11 = vector.broadcast %10 : i32 to vector<128x1xi32>
    %12 = arith.addi %9, %11 : vector<128x1xi32>
    %c2_i32 = arith.constant 2 : i32
    %13 = vector.broadcast %c2_i32 : i32 to vector<128x1xi32>
    %14 = arith.cmpi slt, %12, %13 : vector<128x1xi32>
    %cst_6 = arith.constant 0.000000e+00 : f32
    %15 = vector.broadcast %cst_6 : f32 to vector<128x1xf32>
    %16 = arith.select %14, %4, %15 : vector<128x1xi1>, vector<128x1xf32>
    %cst_7 = arith.constant 0.000000e+00 : f32
    %17 = vector.broadcast %cst_7 : f32 to vector<128x1xf32>
    %18 = arith.select %14, %8, %17 : vector<128x1xi1>, vector<128x1xf32>
    %19 = tpu.iota {dimensions = array<i32: 1>} : vector<128x128xi32>
    %c0_i32 = arith.constant 0 : i32
    %20 = vector.broadcast %c0_i32 : i32 to vector<128x128xi32>
    %21 = arith.cmpi eq, %19, %20 : vector<128x128xi32>
    %c1_i32 = arith.constant 1 : i32
    %22 = vector.broadcast %c1_i32 : i32 to vector<128x128xi32>
    %23 = arith.cmpi eq, %19, %22 : vector<128x128xi32>
    %cst_8 = arith.constant 0.000000e+00 : f32
    %24 = vector.shape_cast %18 : vector<128x1xf32> to vector<128x1xf32>
    %25 = vector.broadcast %24 : vector<128x1xf32> to vector<128x128xf32>
    %26 = vector.broadcast %cst_8 : f32 to vector<128x128xf32>
    %27 = arith.select %23, %25, %26 : vector<128x128xi1>, vector<128x128xf32>
    %28 = vector.shape_cast %16 : vector<128x1xf32> to vector<128x1xf32>
    %29 = vector.broadcast %28 : vector<128x1xf32> to vector<128x128xf32>
    %30 = arith.select %21, %29, %27 : vector<128x128xi1>, vector<128x128xf32>
    %31 = tpu.transpose %30, [1, 0] : vector<128x128xf32> -> vector<128x128xf32>
    %32 = vector.extract_strided_slice %31 {offsets = [0, 0], sizes = [2, 128], strides = [1, 1]} : vector<128x128xf32> to vector<2x128xf32>
    %c0_9 = arith.constant 0 : index
    %c0_10 = arith.constant 0 : index
    %33 = vector.load %arg4[%c0_9, %c0_10] : memref<2x128xf32, #tpu.memory_space<vmem>>, vector<2x128xf32>
    tpu.vector_store %arg4[%c0_9, %c0_10], %32 {strides = array<i32>} : memref<2x128xf32, #tpu.memory_space<vmem>>, vector<2x128xf32>,
    %cst_11 = arith.constant 0.000000e+00 : f32
    %34 = vector.broadcast %cst_11 : f32 to vector<128x1xf32>
    %35 = arith.subf %34, %16 : vector<128x1xf32>
    %cst_12 = arith.constant 0.000000e+00 : f32
    %36 = vector.broadcast %cst_12 : f32 to vector<128x1xf32>
    %37 = arith.maximumf %36, %35 : vector<128x1xf32>
    %38 = vector.broadcast %cst_12 : f32 to vector<128x1xf32>
    %39 = arith.subf %38, %35 : vector<128x1xf32>
    %40 = arith.cmpf one, %39, %39 : vector<128x1xf32>
    %41 = vector.broadcast %cst_12 : f32 to vector<128x1xf32>
    %42 = arith.addf %41, %35 : vector<128x1xf32>
    %43 = math.absf %39 : vector<128x1xf32>
    %cst_13 = arith.constant 0.000000e+00 : f32
    %44 = vector.broadcast %cst_13 : f32 to vector<128x1xf32>
    %45 = arith.subf %44, %43 : vector<128x1xf32>
    %46 = math.exp %45 : vector<128x1xf32>
    %47 = math.log1p %46 : vector<128x1xf32>
    %48 = arith.addf %37, %47 : vector<128x1xf32>
    %49 = arith.select %40, %42, %48 : vector<128x1xi1>, vector<128x1xf32>
    %cst_14 = arith.constant 0.000000e+00 : f32
    %50 = vector.broadcast %cst_14 : f32 to vector<128x1xf32>
    %51 = arith.maximumf %50, %18 : vector<128x1xf32>
    %52 = vector.broadcast %cst_14 : f32 to vector<128x1xf32>
    %53 = arith.subf %52, %18 : vector<128x1xf32>
    %54 = arith.cmpf one, %53, %53 : vector<128x1xf32>
    %55 = vector.broadcast %cst_14 : f32 to vector<128x1xf32>
    %56 = arith.addf %55, %18 : vector<128x1xf32>
    %57 = math.absf %53 : vector<128x1xf32>
    %cst_15 = arith.constant 0.000000e+00 : f32
    %58 = vector.broadcast %cst_15 : f32 to vector<128x1xf32>
    %59 = arith.subf %58, %57 : vector<128x1xf32>
    %60 = math.exp %59 : vector<128x1xf32>
    %61 = math.log1p %60 : vector<128x1xf32>
    %62 = arith.addf %51, %61 : vector<128x1xf32>
    %63 = arith.select %54, %56, %62 : vector<128x1xi1>, vector<128x1xf32>
    %64 = arith.addf %49, %63 : vector<128x1xf32>
    %cst_16 = arith.constant 0.000000e+00 : f32
    %65 = vector.broadcast %cst_16 : f32 to vector<128x1xf32>
    %66 = arith.select %14, %64, %65 : vector<128x1xi1>, vector<128x1xf32>
    %67 = vector.shape_cast %66 : vector<128x1xf32> to vector<1x128x1xf32>
    %cst_17 = arith.constant dense<0.000000e+00> : vector<1xf32>
    %68 = vector.multi_reduction <add>, %67, %cst_17 [1, 2] : vector<1x128x1xf32> to vector<1xf32>
    %69 = vector.shape_cast %68 : vector<1xf32> to vector<1x1x1xf32>
    %70 = vector.extract %69[0, 0, 0] : f32 from vector<1x1x1xf32>
    %71 = vector.broadcast %70 : f32 to vector<1x8x128xf32>
    %c0_18 = arith.constant 0 : index
    %c0_19 = arith.constant 0 : index
    %c0_20 = arith.constant 0 : index
    %72 = vector.load %arg5[%c0_18, %c0_19, %c0_20] : memref<1x8x128xf32, #tpu.memory_space<vmem>>, vector<1x8x128xf32>
    tpu.vector_store %arg5[%c0_18, %c0_19, %c0_20], %71 {strides = array<i32>} : memref<1x8x128xf32, #tpu.memory_space<vmem>>, vector<1x8x128xf32>,
    return
  }
  func.func @transform_0(%arg0: i32) -> (i32, i32) {
    %c0_i32 = arith.constant 0 : i32
    %c0_i32_0 = arith.constant 0 : i32
    return %arg0, %c0_i32 : i32, i32
  }
  func.func @transform_1(%arg0: i32) -> (i32, i32) {
    %c0_i32 = arith.constant 0 : i32
    %c0_i32_0 = arith.constant 0 : i32
    return %arg0, %c0_i32 : i32, i32
  }
  func.func @transform_2(%arg0: i32) -> (i32, i32) {
    %c0_i32 = arith.constant 0 : i32
    %c0_i32_0 = arith.constant 0 : i32
    return %arg0, %c0_i32 : i32, i32
  }
  func.func @transform_3(%arg0: i32) -> (i32, i32) {
    %c0_i32 = arith.constant 0 : i32
    %c0_i32_0 = arith.constant 0 : i32
    return %c0_i32, %arg0 : i32, i32
  }
  func.func @transform_4(%arg0: i32) -> (i32, i32, i32) {
    %c0_i32 = arith.constant 0 : i32
    %c0_i32_0 = arith.constant 0 : i32
    %c0_i32_1 = arith.constant 0 : i32
    return %arg0, %c0_i32, %c0_i32_0 : i32, i32, i32
  }
}

</mosaic_0001>

<llo_original>
// kernel: tpu_custom_call.1
$region0: #{tpu_custom_call.1}
  #allocation0 [shape = 'u32[]', space=smem, size = 0x4, offset = 0x4, fixed_abs, tag = 'smem constant byte address 0x4 - core index']
  #allocation1 [shape = 'u32[144,128]{1,0:T(1,128)}', space=vmem, size = 0x12000, scoped, tag = 'internal scratch']
  %s0 = inlined_call_operand.hbm [shape: f32[2,32], index: 0, kind: input, shape index: {}]
  %s1 = inlined_call_operand.hbm [shape: f32[2,32], index: 1, kind: input, shape index: {}]
  %s2 = inlined_call_operand.vmem [shape: f32[2,32], index: 2, kind: input, shape index: {}]
  %s3 = inlined_call_operand.hbm [shape: f32[2,2], index: 3, kind: output, shape index: {0}]
  %s4 = inlined_call_operand.hbm [shape: f32[1,8,128], index: 4, kind: output, shape index: {1}]
  %5 = xla_tuple %s3, %s4
  %s6 = sld [smem:[#allocation0]]
  $region38: #{tpu_custom_call.1} parent=0
    _
  %s8 = ssub.s32 1, %s6
  %s9 = scalar_select 0, %s8, %s6
  $region1: #{tpu_custom_call.1} parent=0
    #allocation2 [shape = 'u8[65536]{0}', space=vmem, size = 0x10000, scoped, tag = 'input window, operand 0, single buffered']
    #allocation3 [shape = 's32[1]{0}', space=sflag, size = 0x4, scoped, tag = 'scoped memory for tpu_custom_call.1']
    #allocation4 [shape = 's32[1]{0}', space=sflag, size = 0x4, scoped, tag = 'scoped memory for tpu_custom_call.1']
    #allocation5 [shape = 'u8[65536]{0}', space=vmem, size = 0x10000, scoped, tag = 'input window, operand 1, single buffered']
    #allocation6 [shape = 's32[1]{0}', space=sflag, size = 0x4, scoped, tag = 'scoped memory for tpu_custom_call.1']
    #allocation7 [shape = 'u8[1024]{0}', space=vmem, size = 0x400, scoped, tag = 'output window, operand 0, single buffered']
    #allocation8 [shape = 'u8[4096]{0}', space=vmem, size = 0x1000, scoped, tag = 'output window, operand 1, single buffered']
    #allocation9 [shape = 's32[1]{0}', space=sflag, size = 0x4, scoped, tag = 'scoped memory for tpu_custom_call.1']
    %10 = vsyncpa [#allocation3], 0
    %11 = vsyncpa [#allocation6], 0
    %12 = vsyncpa [#allocation4], 0
    %13 = vsyncpa [#allocation9], 0
    // Predicated region
    $region2: #{tpu_custom_call.1} parent=1 // pred_check
      _
    $region3: #{tpu_custom_call.1} parent=1 // pred_check_branch
      %15 = sbr.rel (0) target = $region5
    $region4: #{tpu_custom_call.1} parent=1 // pred_region
      %s17 = ssub.s32 2048, 32
      %18 = vsyncadd [#allocation3], %s17
      %s19 = sshll.u32 [#allocation2], 4
      %s20 = int_to_ptr.vmem [resolvable:$true] %s19
      %25 = dma.hbm_to_vmem [thread:$0]  %s0, 32, %s20, [#allocation3], 32, 32, 2
    $region5: #{tpu_custom_call.1} parent=1 // pred_fallthru
      _
    // Predicated region
    $region6: #{tpu_custom_call.1} parent=1 // pred_check
      _
    $region7: #{tpu_custom_call.1} parent=1 // pred_check_branch
      %27 = sbr.rel (0) target = $region9
    $region8: #{tpu_custom_call.1} parent=1 // pred_region
      %s29 = ssub.s32 2048, 32
      %30 = vsyncadd [#allocation6], %s29
      %s31 = sshll.u32 [#allocation5], 4
      %s32 = int_to_ptr.vmem [resolvable:$true] %s31
      %37 = dma.hbm_to_vmem [thread:$0]  %s1, 32, %s32, [#allocation6], 32, 32, 2
    $region9: #{tpu_custom_call.1} parent=1 // pred_fallthru
      _
    // Predicated region
    $region10: #{tpu_custom_call.1} parent=1 // pred_check
      _
    $region11: #{tpu_custom_call.1} parent=1 // pred_check_branch
      %39 = sbr.rel (0) target = $region13
    $region12: #{tpu_custom_call.1} parent=1 // pred_region
      _
    $region13: #{tpu_custom_call.1} parent=1 // pred_fallthru
      _
    // Predicated region
    $region14: #{tpu_custom_call.1} parent=1 // pred_check
      _
    $region15: #{tpu_custom_call.1} parent=1 // pred_check_branch
      %41 = sbr.rel (0) target = $region17
    $region16: #{tpu_custom_call.1} parent=1 // pred_region
      %42 = dma.done [#allocation3], 2048
    $region17: #{tpu_custom_call.1} parent=1 // pred_fallthru
      _
    // Predicated region
    $region18: #{tpu_custom_call.1} parent=1 // pred_check
      _
    $region19: #{tpu_custom_call.1} parent=1 // pred_check_branch
      %44 = sbr.rel (0) target = $region21
    $region20: #{tpu_custom_call.1} parent=1 // pred_region
      %45 = dma.done [#allocation6], 2048
    $region21: #{tpu_custom_call.1} parent=1 // pred_fallthru
      _
    %v46 = vld [vmem:[#allocation2] sm:$0xff]
    %v47 = vld [vmem:[#allocation2 + $0x8] sm:$0xff]
    %v48 = vld [vmem:[#allocation2 + $0x10] sm:$0xff]
    %v49 = vld [vmem:[#allocation2 + $0x18] sm:$0xff]
    %v50 = vld [vmem:[#allocation2 + $0x20] sm:$0xff]
    %v51 = vld [vmem:[#allocation2 + $0x28] sm:$0xff]
    %v52 = vld [vmem:[#allocation2 + $0x30] sm:$0xff]
    %v53 = vld [vmem:[#allocation2 + $0x38] sm:$0xff]
    %v54 = vld [vmem:[#allocation2 + $0x40] sm:$0xff]
    %v55 = vld [vmem:[#allocation2 + $0x48] sm:$0xff]
    %v56 = vld [vmem:[#allocation2 + $0x50] sm:$0xff]
    %v57 = vld [vmem:[#allocation2 + $0x58] sm:$0xff]
    %v58 = vld [vmem:[#allocation2 + $0x60] sm:$0xff]
    %v59 = vld [vmem:[#allocation2 + $0x68] sm:$0xff]
    %v60 = vld [vmem:[#allocation2 + $0x70] sm:$0xff]
    %v61 = vld [vmem:[#allocation2 + $0x78] sm:$0xff]
    %v62 = vld [vmem:[#allocation5] sm:$0xff]
    %v63 = vld [vmem:[#allocation5 + $0x8] sm:$0xff]
    %v64 = vld [vmem:[#allocation5 + $0x10] sm:$0xff]
    %v65 = vld [vmem:[#allocation5 + $0x18] sm:$0xff]
    %v66 = vld [vmem:[#allocation5 + $0x20] sm:$0xff]
    %v67 = vld [vmem:[#allocation5 + $0x28] sm:$0xff]
    %v68 = vld [vmem:[#allocation5 + $0x30] sm:$0xff]
    %v69 = vld [vmem:[#allocation5 + $0x38] sm:$0xff]
    %v70 = vld [vmem:[#allocation5 + $0x40] sm:$0xff]
    %v71 = vld [vmem:[#allocation5 + $0x48] sm:$0xff]
    %v72 = vld [vmem:[#allocation5 + $0x50] sm:$0xff]
    %v73 = vld [vmem:[#allocation5 + $0x58] sm:$0xff]
    %v74 = vld [vmem:[#allocation5 + $0x60] sm:$0xff]
    %v75 = vld [vmem:[#allocation5 + $0x68] sm:$0xff]
    %v76 = vld [vmem:[#allocation5 + $0x70] sm:$0xff]
    %v77 = vld [vmem:[#allocation5 + $0x78] sm:$0xff]
    %v78 = vmul.f32 %v62, %v46
    %v79 = vmul.f32 %v63, %v47
    %v80 = vmul.f32 %v64, %v48
    %v81 = vmul.f32 %v65, %v49
    %v82 = vmul.f32 %v66, %v50
    %v83 = vmul.f32 %v67, %v51
    %v84 = vmul.f32 %v68, %v52
    %v85 = vmul.f32 %v69, %v53
    %v86 = vmul.f32 %v70, %v54
    %v87 = vmul.f32 %v71, %v55
    %v88 = vmul.f32 %v72, %v56
    %v89 = vmul.f32 %v73, %v57
    %v90 = vmul.f32 %v74, %v58
    %v91 = vmul.f32 %v75, %v59
    %v92 = vmul.f32 %v76, %v60
    %v93 = vmul.f32 %v77, %v61
    %vm94 = vcmask 261120
    %v95 = vsel %vm94, %v78, 0.0
    %96 = vadd.xlane.f32.xlu0 %v95
    %v97 = vpop.xlane.xlu0 %96
    %v98 = vsel %vm94, %v79, 0.0
    %99 = vadd.xlane.f32.xlu0 %v98
    %v100 = vpop.xlane.xlu0 %99
    %v101 = vsel %vm94, %v80, 0.0
    %102 = vadd.xlane.f32.xlu0 %v101
    %v103 = vpop.xlane.xlu0 %102
    %v104 = vsel %vm94, %v81, 0.0
    %105 = vadd.xlane.f32.xlu0 %v104
    %v106 = vpop.xlane.xlu0 %105
    %v107 = vsel %vm94, %v82, 0.0
    %108 = vadd.xlane.f32.xlu0 %v107
    %v109 = vpop.xlane.xlu0 %108
    %v110 = vsel %vm94, %v83, 0.0
    %111 = vadd.xlane.f32.xlu0 %v110
    %v112 = vpop.xlane.xlu0 %111
    %v113 = vsel %vm94, %v84, 0.0
    %114 = vadd.xlane.f32.xlu0 %v113
    %v115 = vpop.xlane.xlu0 %114
    %v116 = vsel %vm94, %v85, 0.0
    %117 = vadd.xlane.f32.xlu0 %v116
    %v118 = vpop.xlane.xlu0 %117
    %v119 = vsel %vm94, %v86, 0.0
    %120 = vadd.xlane.f32.xlu0 %v119
    %v121 = vpop.xlane.xlu0 %120
    %v122 = vsel %vm94, %v87, 0.0
    %123 = vadd.xlane.f32.xlu0 %v122
    %v124 = vpop.xlane.xlu0 %123
    %v125 = vsel %vm94, %v88, 0.0
    %126 = vadd.xlane.f32.xlu0 %v125
    %v127 = vpop.xlane.xlu0 %126
    %v128 = vsel %vm94, %v89, 0.0
    %129 = vadd.xlane.f32.xlu0 %v128
    %v130 = vpop.xlane.xlu0 %129
    %v131 = vsel %vm94, %v90, 0.0
    %132 = vadd.xlane.f32.xlu0 %v131
    %v133 = vpop.xlane.xlu0 %132
    %v134 = vsel %vm94, %v91, 0.0
    %135 = vadd.xlane.f32.xlu0 %v134
    %v136 = vpop.xlane.xlu0 %135
    %v137 = vsel %vm94, %v92, 0.0
    %138 = vadd.xlane.f32.xlu0 %v137
    %v139 = vpop.xlane.xlu0 %138
    %v140 = vsel %vm94, %v93, 0.0
    %141 = vadd.xlane.f32.xlu0 %v140
    %v142 = vpop.xlane.xlu0 %141
    %v143 = vld [vmem:[%s2] sm:$0xff]
    %v144 = vld [vmem:[%s2 + $0x8] sm:$0xff]
    %v145 = vld [vmem:[%s2 + $0x10] sm:$0xff]
    %v146 = vld [vmem:[%s2 + $0x18] sm:$0xff]
    %v147 = vld [vmem:[%s2 + $0x20] sm:$0xff]
    %v148 = vld [vmem:[%s2 + $0x28] sm:$0xff]
    %v149 = vld [vmem:[%s2 + $0x30] sm:$0xff]
    %v150 = vld [vmem:[%s2 + $0x38] sm:$0xff]
    %v151 = vld [vmem:[%s2 + $0x40] sm:$0xff]
    %v152 = vld [vmem:[%s2 + $0x48] sm:$0xff]
    %v153 = vld [vmem:[%s2 + $0x50] sm:$0xff]
    %v154 = vld [vmem:[%s2 + $0x58] sm:$0xff]
    %v155 = vld [vmem:[%s2 + $0x60] sm:$0xff]
    %v156 = vld [vmem:[%s2 + $0x68] sm:$0xff]
    %v157 = vld [vmem:[%s2 + $0x70] sm:$0xff]
    %v158 = vld [vmem:[%s2 + $0x78] sm:$0xff]
    %v159 = vmul.f32 %v143, %v46
    %v160 = vmul.f32 %v144, %v47
    %v161 = vmul.f32 %v145, %v48
    %v162 = vmul.f32 %v146, %v49
    %v163 = vmul.f32 %v147, %v50
    %v164 = vmul.f32 %v148, %v51
    %v165 = vmul.f32 %v149, %v52
    %v166 = vmul.f32 %v150, %v53
    %v167 = vmul.f32 %v151, %v54
    %v168 = vmul.f32 %v152, %v55
    %v169 = vmul.f32 %v153, %v56
    %v170 = vmul.f32 %v154, %v57
    %v171 = vmul.f32 %v155, %v58
    %v172 = vmul.f32 %v156, %v59
    %v173 = vmul.f32 %v157, %v60
    %v174 = vmul.f32 %v158, %v61
    %v175 = vsel %vm94, %v159, 0.0
    %176 = vadd.xlane.f32.xlu0 %v175
    %v177 = vpop.xlane.xlu0 %176
    %v178 = vsel %vm94, %v160, 0.0
    %179 = vadd.xlane.f32.xlu0 %v178
    %v180 = vpop.xlane.xlu0 %179
    %v181 = vsel %vm94, %v161, 0.0
    %182 = vadd.xlane.f32.xlu0 %v181
    %v183 = vpop.xlane.xlu0 %182
    %v184 = vsel %vm94, %v162, 0.0
    %185 = vadd.xlane.f32.xlu0 %v184
    %v186 = vpop.xlane.xlu0 %185
    %v187 = vsel %vm94, %v163, 0.0
    %188 = vadd.xlane.f32.xlu0 %v187
    %v189 = vpop.xlane.xlu0 %188
    %v190 = vsel %vm94, %v164, 0.0
    %191 = vadd.xlane.f32.xlu0 %v190
    %v192 = vpop.xlane.xlu0 %191
    %v193 = vsel %vm94, %v165, 0.0
    %194 = vadd.xlane.f32.xlu0 %v193
    %v195 = vpop.xlane.xlu0 %194
    %v196 = vsel %vm94, %v166, 0.0
    %197 = vadd.xlane.f32.xlu0 %v196
    %v198 = vpop.xlane.xlu0 %197
    %v199 = vsel %vm94, %v167, 0.0
    %200 = vadd.xlane.f32.xlu0 %v199
    %v201 = vpop.xlane.xlu0 %200
    %v202 = vsel %vm94, %v168, 0.0
    %203 = vadd.xlane.f32.xlu0 %v202
    %v204 = vpop.xlane.xlu0 %203
    %v205 = vsel %vm94, %v169, 0.0
    %206 = vadd.xlane.f32.xlu0 %v205
    %v207 = vpop.xlane.xlu0 %206
    %v208 = vsel %vm94, %v170, 0.0
    %209 = vadd.xlane.f32.xlu0 %v208
    %v210 = vpop.xlane.xlu0 %209
    %v211 = vsel %vm94, %v171, 0.0
    %212 = vadd.xlane.f32.xlu0 %v211
    %v213 = vpop.xlane.xlu0 %212
    %v214 = vsel %vm94, %v172, 0.0
    %215 = vadd.xlane.f32.xlu0 %v214
    %v216 = vpop.xlane.xlu0 %215
    %v217 = vsel %vm94, %v173, 0.0
    %218 = vadd.xlane.f32.xlu0 %v217
    %v219 = vpop.xlane.xlu0 %218
    %v220 = vsel %vm94, %v174, 0.0
    %221 = vadd.xlane.f32.xlu0 %v220
    %v222 = vpop.xlane.xlu0 %221
    %v223 = vlaneseq
    %v224 = vshrl.u32 %v223, 7
    %v225 = vadd.s32 %v224, 8
    %v226 = vadd.s32 %v224, 16
    %v227 = vadd.s32 %v224, 24
    %v228 = vadd.s32 %v224, 32
    %v229 = vadd.s32 %v224, 40
    %v230 = vadd.s32 %v224, 48
    %v231 = vadd.s32 %v224, 56
    %v232 = vadd.s32 %v224, 64
    %v233 = vadd.s32 %v224, 72
    %v234 = vadd.s32 %v224, 80
    %v235 = vadd.s32 %v224, 88
    %v236 = vadd.s32 %v224, 96
    %v237 = vadd.s32 %v224, 104
    %v238 = vadd.s32 %v224, 112
    %v239 = vadd.s32 %v224, 120
    %s240 = smul.u32 0, 128
    %v241 = vstv %s240
    %v242 = vadd.s32 %v224, %v241
    %v243 = vadd.s32 %v225, %v241
    %v244 = vadd.s32 %v226, %v241
    %v245 = vadd.s32 %v227, %v241
    %v246 = vadd.s32 %v228, %v241
    %v247 = vadd.s32 %v229, %v241
    %v248 = vadd.s32 %v230, %v241
    %v249 = vadd.s32 %v231, %v241
    %v250 = vadd.s32 %v232, %v241
    %v251 = vadd.s32 %v233, %v241
    %v252 = vadd.s32 %v234, %v241
    %v253 = vadd.s32 %v235, %v241
    %v254 = vadd.s32 %v236, %v241
    %v255 = vadd.s32 %v237, %v241
    %v256 = vadd.s32 %v238, %v241
    %v257 = vadd.s32 %v239, %v241
    %vm258 = vcmp.lt.s32.totalorder %v242, 2
    %vm259 = vcmp.lt.s32.totalorder %v243, 2
    %vm260 = vcmp.lt.s32.totalorder %v244, 2
    %vm261 = vcmp.lt.s32.totalorder %v245, 2
    %vm262 = vcmp.lt.s32.totalorder %v246, 2
    %vm263 = vcmp.lt.s32.totalorder %v247, 2
    %vm264 = vcmp.lt.s32.totalorder %v248, 2
    %vm265 = vcmp.lt.s32.totalorder %v249, 2
    %vm266 = vcmp.lt.s32.totalorder %v250, 2
    %vm267 = vcmp.lt.s32.totalorder %v251, 2
    %vm268 = vcmp.lt.s32.totalorder %v252, 2
    %vm269 = vcmp.lt.s32.totalorder %v253, 2
    %vm270 = vcmp.lt.s32.totalorder %v254, 2
    %vm271 = vcmp.lt.s32.totalorder %v255, 2
    %vm272 = vcmp.lt.s32.totalorder %v256, 2
    %vm273 = vcmp.lt.s32.totalorder %v257, 2
    %v274 = vsel %vm258, %v97, 0.0
    %v275 = vsel %vm259, %v100, 0.0
    %v276 = vsel %vm260, %v103, 0.0
    %v277 = vsel %vm261, %v106, 0.0
    %v278 = vsel %vm262, %v109, 0.0
    %v279 = vsel %vm263, %v112, 0.0
    %v280 = vsel %vm264, %v115, 0.0
    %v281 = vsel %vm265, %v118, 0.0
    %v282 = vsel %vm266, %v121, 0.0
    %v283 = vsel %vm267, %v124, 0.0
    %v284 = vsel %vm268, %v127, 0.0
    %v285 = vsel %vm269, %v130, 0.0
    %v286 = vsel %vm270, %v133, 0.0
    %v287 = vsel %vm271, %v136, 0.0
    %v288 = vsel %vm272, %v139, 0.0
    %v289 = vsel %vm273, %v142, 0.0
    %v290 = vsel %vm258, %v177, 0.0
    %v291 = vsel %vm259, %v180, 0.0
    %v292 = vsel %vm260, %v183, 0.0
    %v293 = vsel %vm261, %v186, 0.0
    %v294 = vsel %vm262, %v189, 0.0
    %v295 = vsel %vm263, %v192, 0.0
    %v296 = vsel %vm264, %v195, 0.0
    %v297 = vsel %vm265, %v198, 0.0
    %v298 = vsel %vm266, %v201, 0.0
    %v299 = vsel %vm267, %v204, 0.0
    %v300 = vsel %vm268, %v207, 0.0
    %v301 = vsel %vm269, %v210, 0.0
    %v302 = vsel %vm270, %v213, 0.0
    %v303 = vsel %vm271, %v216, 0.0
    %v304 = vsel %vm272, %v219, 0.0
    %v305 = vsel %vm273, %v222, 0.0
    %v306 = vlaneseq
    %v307 = vand.u32 %v306, 127
    %vm308 = vcmp.eq.s32.totalorder %v307, 0
    %vm309 = vcmp.eq.s32.totalorder %v307, 1
    %v310 = vsel %vm309, %v290, 0.0
    %v311 = vsel %vm309, %v291, 0.0
    %v312 = vsel %vm309, %v292, 0.0
    %v313 = vsel %vm309, %v293, 0.0
    %v314 = vsel %vm309, %v294, 0.0
    %v315 = vsel %vm309, %v295, 0.0
    %v316 = vsel %vm309, %v296, 0.0
    %v317 = vsel %vm309, %v297, 0.0
    %v318 = vsel %vm309, %v298, 0.0
    %v319 = vsel %vm309, %v299, 0.0
    %v320 = vsel %vm309, %v300, 0.0
    %v321 = vsel %vm309, %v301, 0.0
    %v322 = vsel %vm309, %v302, 0.0
    %v323 = vsel %vm309, %v303, 0.0
    %v324 = vsel %vm309, %v304, 0.0
    %v325 = vsel %vm309, %v305, 0.0
    %v326 = vsel %vm308, %v274, %v310
    %v327 = vsel %vm308, %v275, %v311
    %v328 = vsel %vm308, %v276, %v312
    %v329 = vsel %vm308, %v277, %v313
    %v330 = vsel %vm308, %v278, %v314
    %v331 = vsel %vm308, %v279, %v315
    %v332 = vsel %vm308, %v280, %v316
    %v333 = vsel %vm308, %v281, %v317
    %v334 = vsel %vm308, %v282, %v318
    %v335 = vsel %vm308, %v283, %v319
    %v336 = vsel %vm308, %v284, %v320
    %v337 = vsel %vm308, %v285, %v321
    %v338 = vsel %vm308, %v286, %v322
    %v339 = vsel %vm308, %v287, %v323
    %v340 = vsel %vm308, %v288, %v324
    %v341 = vsel %vm308, %v289, %v325
    %342 = vxpose.xlu0.b32.start [1/16] %v326, 128
    %343 = vxpose.xlu0.b32.cont [2/16] %v327, 128
    %344 = vxpose.xlu0.b32.cont [3/16] %v328, 128
    %345 = vxpose.xlu0.b32.cont [4/16] %v329, 128
    %346 = vxpose.xlu0.b32.cont [5/16] %v330, 128
    %347 = vxpose.xlu0.b32.cont [6/16] %v331, 128
    %348 = vxpose.xlu0.b32.cont [7/16] %v332, 128
    %349 = vxpose.xlu0.b32.cont [8/16] %v333, 128
    %350 = vxpose.xlu0.b32.cont [9/16] %v334, 128
    %351 = vxpose.xlu0.b32.cont [10/16] %v335, 128
    %352 = vxpose.xlu0.b32.cont [11/16] %v336, 128
    %353 = vxpose.xlu0.b32.cont [12/16] %v337, 128
    %354 = vxpose.xlu0.b32.cont [13/16] %v338, 128
    %355 = vxpose.xlu0.b32.cont [14/16] %v339, 128
    %356 = vxpose.xlu0.b32.cont [15/16] %v340, 128
    %357 = vxpose.xlu0.b32.end [16/16] %v341, 128
    %v358 = vpop.trf.xlu0
    %v359 = vpop.trf.xlu0
    %v360 = vpop.trf.xlu0
    %v361 = vpop.trf.xlu0
    %v362 = vpop.trf.xlu0
    %v363 = vpop.trf.xlu0
    %v364 = vpop.trf.xlu0
    %v365 = vpop.trf.xlu0
    %v366 = vpop.trf.xlu0
    %v367 = vpop.trf.xlu0
    %v368 = vpop.trf.xlu0
    %v369 = vpop.trf.xlu0
    %v370 = vpop.trf.xlu0
    %v371 = vpop.trf.xlu0
    %v372 = vpop.trf.xlu0
    %v373 = vpop.trf.xlu0
    %374 = vst [vmem:[#allocation7] sm:$0x3] %v358
    %v375 = vsub.f32 0.0, %v274
    %v376 = vsub.f32 0.0, %v275
    %v377 = vsub.f32 0.0, %v276
    %v378 = vsub.f32 0.0, %v277
    %v379 = vsub.f32 0.0, %v278
    %v380 = vsub.f32 0.0, %v279
    %v381 = vsub.f32 0.0, %v280
    %v382 = vsub.f32 0.0, %v281
    %v383 = vsub.f32 0.0, %v282
    %v384 = vsub.f32 0.0, %v283
    %v385 = vsub.f32 0.0, %v284
    %v386 = vsub.f32 0.0, %v285
    %v387 = vsub.f32 0.0, %v286
    %v388 = vsub.f32 0.0, %v287
    %v389 = vsub.f32 0.0, %v288
    %v390 = vsub.f32 0.0, %v289
    %v391 = vmax.f32 %v375, 0.0
    %v392 = vmax.f32 %v376, 0.0
    %v393 = vmax.f32 %v377, 0.0
    %v394 = vmax.f32 %v378, 0.0
    %v395 = vmax.f32 %v379, 0.0
    %v396 = vmax.f32 %v380, 0.0
    %v397 = vmax.f32 %v381, 0.0
    %v398 = vmax.f32 %v382, 0.0
    %v399 = vmax.f32 %v383, 0.0
    %v400 = vmax.f32 %v384, 0.0
    %v401 = vmax.f32 %v385, 0.0
    %v402 = vmax.f32 %v386, 0.0
    %v403 = vmax.f32 %v387, 0.0
    %v404 = vmax.f32 %v388, 0.0
    %v405 = vmax.f32 %v389, 0.0
    %v406 = vmax.f32 %v390, 0.0
    %v407 = vsub.f32 0.0, %v375
    %v408 = vsub.f32 0.0, %v376
    %v409 = vsub.f32 0.0, %v377
    %v410 = vsub.f32 0.0, %v378
    %v411 = vsub.f32 0.0, %v379
    %v412 = vsub.f32 0.0, %v380
    %v413 = vsub.f32 0.0, %v381
    %v414 = vsub.f32 0.0, %v382
    %v415 = vsub.f32 0.0, %v383
    %v416 = vsub.f32 0.0, %v384
    %v417 = vsub.f32 0.0, %v385
    %v418 = vsub.f32 0.0, %v386
    %v419 = vsub.f32 0.0, %v387
    %v420 = vsub.f32 0.0, %v388
    %v421 = vsub.f32 0.0, %v389
    %v422 = vsub.f32 0.0, %v390
    %vm423 = vcmp.ne.f32.partialorder %v407, %v407
    %vm424 = vcmp.ne.f32.partialorder %v408, %v408
    %vm425 = vcmp.ne.f32.partialorder %v409, %v409
    %vm426 = vcmp.ne.f32.partialorder %v410, %v410
    %vm427 = vcmp.ne.f32.partialorder %v411, %v411
    %vm428 = vcmp.ne.f32.partialorder %v412, %v412
    %vm429 = vcmp.ne.f32.partialorder %v413, %v413
    %vm430 = vcmp.ne.f32.partialorder %v414, %v414
    %vm431 = vcmp.ne.f32.partialorder %v415, %v415
    %vm432 = vcmp.ne.f32.partialorder %v416, %v416
    %vm433 = vcmp.ne.f32.partialorder %v417, %v417
    %vm434 = vcmp.ne.f32.partialorder %v418, %v418
    %vm435 = vcmp.ne.f32.partialorder %v419, %v419
    %vm436 = vcmp.ne.f32.partialorder %v420, %v420
    %vm437 = vcmp.ne.f32.partialorder %v421, %v421
    %vm438 = vcmp.ne.f32.partialorder %v422, %v422
    %v439 = vadd.f32 %v375, 0.0
    %v440 = vadd.f32 %v376, 0.0
    %v441 = vadd.f32 %v377, 0.0
    %v442 = vadd.f32 %v378, 0.0
    %v443 = vadd.f32 %v379, 0.0
    %v444 = vadd.f32 %v380, 0.0
    %v445 = vadd.f32 %v381, 0.0
    %v446 = vadd.f32 %v382, 0.0
    %v447 = vadd.f32 %v383, 0.0
    %v448 = vadd.f32 %v384, 0.0
    %v449 = vadd.f32 %v385, 0.0
    %v450 = vadd.f32 %v386, 0.0
    %v451 = vadd.f32 %v387, 0.0
    %v452 = vadd.f32 %v388, 0.0
    %v453 = vadd.f32 %v389, 0.0
    %v454 = vadd.f32 %v390, 0.0
    %v455 = vand.u32 2147483647, %v407
    %v456 = vand.u32 2147483647, %v408
    %v457 = vand.u32 2147483647, %v409
    %v458 = vand.u32 2147483647, %v410
    %v459 = vand.u32 2147483647, %v411
    %v460 = vand.u32 2147483647, %v412
    %v461 = vand.u32 2147483647, %v413
    %v462 = vand.u32 2147483647, %v414
    %v463 = vand.u32 2147483647, %v415
    %v464 = vand.u32 2147483647, %v416
    %v465 = vand.u32 2147483647, %v417
    %v466 = vand.u32 2147483647, %v418
    %v467 = vand.u32 2147483647, %v419
    %v468 = vand.u32 2147483647, %v420
    %v469 = vand.u32 2147483647, %v421
    %v470 = vand.u32 2147483647, %v422
    %v471 = vsub.f32 0.0, %v455
    %v472 = vsub.f32 0.0, %v456
    %v473 = vsub.f32 0.0, %v457
    %v474 = vsub.f32 0.0, %v458
    %v475 = vsub.f32 0.0, %v459
    %v476 = vsub.f32 0.0, %v460
    %v477 = vsub.f32 0.0, %v461
    %v478 = vsub.f32 0.0, %v462
    %v479 = vsub.f32 0.0, %v463
    %v480 = vsub.f32 0.0, %v464
    %v481 = vsub.f32 0.0, %v465
    %v482 = vsub.f32 0.0, %v466
    %v483 = vsub.f32 0.0, %v467
    %v484 = vsub.f32 0.0, %v468
    %v485 = vsub.f32 0.0, %v469
    %v486 = vsub.f32 0.0, %v470
    %v487 = vmul.f32 %v471, 1.442695
    %v488 = vpow.pop %v487
    %v489 = vmul.f32 %v472, 1.442695
    %v490 = vpow.pop %v489
    %v491 = vmul.f32 %v473, 1.442695
    %v492 = vpow.pop %v491
    %v493 = vmul.f32 %v474, 1.442695
    %v494 = vpow.pop %v493
    %v495 = vmul.f32 %v475, 1.442695
    %v496 = vpow.pop %v495
    %v497 = vmul.f32 %v476, 1.442695
    %v498 = vpow.pop %v497
    %v499 = vmul.f32 %v477, 1.442695
    %v500 = vpow.pop %v499
    %v501 = vmul.f32 %v478, 1.442695
    %v502 = vpow.pop %v501
    %v503 = vmul.f32 %v479, 1.442695
    %v504 = vpow.pop %v503
    %v505 = vmul.f32 %v480, 1.442695
    %v506 = vpow.pop %v505
    %v507 = vmul.f32 %v481, 1.442695
    %v508 = vpow.pop %v507
    %v509 = vmul.f32 %v482, 1.442695
    %v510 = vpow.pop %v509
    %v511 = vmul.f32 %v483, 1.442695
    %v512 = vpow.pop %v511
    %v513 = vmul.f32 %v484, 1.442695
    %v514 = vpow.pop %v513
    %v515 = vmul.f32 %v485, 1.442695
    %v516 = vpow.pop %v515
    %v517 = vmul.f32 %v486, 1.442695
    %v518 = vpow.pop %v517
    %v519 = vadd.f32 %v488, 1.0
    %v520 = vlog2.pop %v519
    %v521 = vmul.f32 %v520, 0.6931472
    %v522 = vmul.f32 -0.5, %v488
    %v523 = vadd.f32 %v522, 1.0
    %v524 = vmul.f32 %v523, %v488
    %v525 = vand.u32 2147483647, %v488
    %vm526 = vcmp.lt.f32.partialorder %v525, 0.0004427343
    %v527 = vsel %vm526, %v524, %v521
    %v528 = vadd.f32 %v490, 1.0
    %v529 = vlog2.pop %v528
    %v530 = vmul.f32 %v529, 0.6931472
    %v531 = vmul.f32 -0.5, %v490
    %v532 = vadd.f32 %v531, 1.0
    %v533 = vmul.f32 %v532, %v490
    %v534 = vand.u32 2147483647, %v490
    %vm535 = vcmp.lt.f32.partialorder %v534, 0.0004427343
    %v536 = vsel %vm535, %v533, %v530
    %v537 = vadd.f32 %v492, 1.0
    %v538 = vlog2.pop %v537
    %v539 = vmul.f32 %v538, 0.6931472
    %v540 = vmul.f32 -0.5, %v492
    %v541 = vadd.f32 %v540, 1.0
    %v542 = vmul.f32 %v541, %v492
    %v543 = vand.u32 2147483647, %v492
    %vm544 = vcmp.lt.f32.partialorder %v543, 0.0004427343
    %v545 = vsel %vm544, %v542, %v539
    %v546 = vadd.f32 %v494, 1.0
    %v547 = vlog2.pop %v546
    %v548 = vmul.f32 %v547, 0.6931472
    %v549 = vmul.f32 -0.5, %v494
    %v550 = vadd.f32 %v549, 1.0
    %v551 = vmul.f32 %v550, %v494
    %v552 = vand.u32 2147483647, %v494
    %vm553 = vcmp.lt.f32.partialorder %v552, 0.0004427343
    %v554 = vsel %vm553, %v551, %v548
    %v555 = vadd.f32 %v496, 1.0
    %v556 = vlog2.pop %v555
    %v557 = vmul.f32 %v556, 0.6931472
    %v558 = vmul.f32 -0.5, %v496
    %v559 = vadd.f32 %v558, 1.0
    %v560 = vmul.f32 %v559, %v496
    %v561 = vand.u32 2147483647, %v496
    %vm562 = vcmp.lt.f32.partialorder %v561, 0.0004427343
    %v563 = vsel %vm562, %v560, %v557
    %v564 = vadd.f32 %v498, 1.0
    %v565 = vlog2.pop %v564
    %v566 = vmul.f32 %v565, 0.6931472
    %v567 = vmul.f32 -0.5, %v498
    %v568 = vadd.f32 %v567, 1.0
    %v569 = vmul.f32 %v568, %v498
    %v570 = vand.u32 2147483647, %v498
    %vm571 = vcmp.lt.f32.partialorder %v570, 0.0004427343
    %v572 = vsel %vm571, %v569, %v566
    %v573 = vadd.f32 %v500, 1.0
    %v574 = vlog2.pop %v573
    %v575 = vmul.f32 %v574, 0.6931472
    %v576 = vmul.f32 -0.5, %v500
    %v577 = vadd.f32 %v576, 1.0
    %v578 = vmul.f32 %v577, %v500
    %v579 = vand.u32 2147483647, %v500
    %vm580 = vcmp.lt.f32.partialorder %v579, 0.0004427343
    %v581 = vsel %vm580, %v578, %v575
    %v582 = vadd.f32 %v502, 1.0
    %v583 = vlog2.pop %v582
    %v584 = vmul.f32 %v583, 0.6931472
    %v585 = vmul.f32 -0.5, %v502
    %v586 = vadd.f32 %v585, 1.0
    %v587 = vmul.f32 %v586, %v502
    %v588 = vand.u32 2147483647, %v502
    %vm589 = vcmp.lt.f32.partialorder %v588, 0.0004427343
    %v590 = vsel %vm589, %v587, %v584
    %v591 = vadd.f32 %v504, 1.0
    %v592 = vlog2.pop %v591
    %v593 = vmul.f32 %v592, 0.6931472
    %v594 = vmul.f32 -0.5, %v504
    %v595 = vadd.f32 %v594, 1.0
    %v596 = vmul.f32 %v595, %v504
    %v597 = vand.u32 2147483647, %v504
    %vm598 = vcmp.lt.f32.partialorder %v597, 0.0004427343
    %v599 = vsel %vm598, %v596, %v593
    %v600 = vadd.f32 %v506, 1.0
    %v601 = vlog2.pop %v600
    %v602 = vmul.f32 %v601, 0.6931472
    %v603 = vmul.f32 -0.5, %v506
    %v604 = vadd.f32 %v603, 1.0
    %v605 = vmul.f32 %v604, %v506
    %v606 = vand.u32 2147483647, %v506
    %vm607 = vcmp.lt.f32.partialorder %v606, 0.0004427343
    %v608 = vsel %vm607, %v605, %v602
    %v609 = vadd.f32 %v508, 1.0
    %v610 = vlog2.pop %v609
    %v611 = vmul.f32 %v610, 0.6931472
    %v612 = vmul.f32 -0.5, %v508
    %v613 = vadd.f32 %v612, 1.0
    %v614 = vmul.f32 %v613, %v508
    %v615 = vand.u32 2147483647, %v508
    %vm616 = vcmp.lt.f32.partialorder %v615, 0.0004427343
    %v617 = vsel %vm616, %v614, %v611
    %v618 = vadd.f32 %v510, 1.0
    %v619 = vlog2.pop %v618
    %v620 = vmul.f32 %v619, 0.6931472
    %v621 = vmul.f32 -0.5, %v510
    %v622 = vadd.f32 %v621, 1.0
    %v623 = vmul.f32 %v622, %v510
    %v624 = vand.u32 2147483647, %v510
    %vm625 = vcmp.lt.f32.partialorder %v624, 0.0004427343
    %v626 = vsel %vm625, %v623, %v620
    %v627 = vadd.f32 %v512, 1.0
    %v628 = vlog2.pop %v627
    %v629 = vmul.f32 %v628, 0.6931472
    %v630 = vmul.f32 -0.5, %v512
    %v631 = vadd.f32 %v630, 1.0
    %v632 = vmul.f32 %v631, %v512
    %v633 = vand.u32 2147483647, %v512
    %vm634 = vcmp.lt.f32.partialorder %v633, 0.0004427343
    %v635 = vsel %vm634, %v632, %v629
    %v636 = vadd.f32 %v514, 1.0
    %v637 = vlog2.pop %v636
    %v638 = vmul.f32 %v637, 0.6931472
    %v639 = vmul.f32 -0.5, %v514
    %v640 = vadd.f32 %v639, 1.0
    %v641 = vmul.f32 %v640, %v514
    %v642 = vand.u32 2147483647, %v514
    %vm643 = vcmp.lt.f32.partialorder %v642, 0.0004427343
    %v644 = vsel %vm643, %v641, %v638
    %v645 = vadd.f32 %v516, 1.0
    %v646 = vlog2.pop %v645
    %v647 = vmul.f32 %v646, 0.6931472
    %v648 = vmul.f32 -0.5, %v516
    %v649 = vadd.f32 %v648, 1.0
    %v650 = vmul.f32 %v649, %v516
    %v651 = vand.u32 2147483647, %v516
    %vm652 = vcmp.lt.f32.partialorder %v651, 0.0004427343
    %v653 = vsel %vm652, %v650, %v647
    %v654 = vadd.f32 %v518, 1.0
    %v655 = vlog2.pop %v654
    %v656 = vmul.f32 %v655, 0.6931472
    %v657 = vmul.f32 -0.5, %v518
    %v658 = vadd.f32 %v657, 1.0
    %v659 = vmul.f32 %v658, %v518
    %v660 = vand.u32 2147483647, %v518
    %vm661 = vcmp.lt.f32.partialorder %v660, 0.0004427343
    %v662 = vsel %vm661, %v659, %v656
    %v663 = vadd.f32 %v391, %v527
    %v664 = vadd.f32 %v392, %v536
    %v665 = vadd.f32 %v393, %v545
    %v666 = vadd.f32 %v394, %v554
    %v667 = vadd.f32 %v395, %v563
    %v668 = vadd.f32 %v396, %v572
    %v669 = vadd.f32 %v397, %v581
    %v670 = vadd.f32 %v398, %v590
    %v671 = vadd.f32 %v399, %v599
    %v672 = vadd.f32 %v400, %v608
    %v673 = vadd.f32 %v401, %v617
    %v674 = vadd.f32 %v402, %v626
    %v675 = vadd.f32 %v403, %v635
    %v676 = vadd.f32 %v404, %v644
    %v677 = vadd.f32 %v405, %v653
    %v678 = vadd.f32 %v406, %v662
    %v679 = vsel %vm423, %v439, %v663
    %v680 = vsel %vm424, %v440, %v664
    %v681 = vsel %vm425, %v441, %v665
    %v682 = vsel %vm426, %v442, %v666
    %v683 = vsel %vm427, %v443, %v667
    %v684 = vsel %vm428, %v444, %v668
    %v685 = vsel %vm429, %v445, %v669
    %v686 = vsel %vm430, %v446, %v670
    %v687 = vsel %vm431, %v447, %v671
    %v688 = vsel %vm432, %v448, %v672
    %v689 = vsel %vm433, %v449, %v673
    %v690 = vsel %vm434, %v450, %v674
    %v691 = vsel %vm435, %v451, %v675
    %v692 = vsel %vm436, %v452, %v676
    %v693 = vsel %vm437, %v453, %v677
    %v694 = vsel %vm438, %v454, %v678
    %v695 = vmax.f32 %v290, 0.0
    %v696 = vmax.f32 %v291, 0.0
    %v697 = vmax.f32 %v292, 0.0
    %v698 = vmax.f32 %v293, 0.0
    %v699 = vmax.f32 %v294, 0.0
    %v700 = vmax.f32 %v295, 0.0
    %v701 = vmax.f32 %v296, 0.0
    %v702 = vmax.f32 %v297, 0.0
    %v703 = vmax.f32 %v298, 0.0
    %v704 = vmax.f32 %v299, 0.0
    %v705 = vmax.f32 %v300, 0.0
    %v706 = vmax.f32 %v301, 0.0
    %v707 = vmax.f32 %v302, 0.0
    %v708 = vmax.f32 %v303, 0.0
    %v709 = vmax.f32 %v304, 0.0
    %v710 = vmax.f32 %v305, 0.0
    %v711 = vsub.f32 0.0, %v290
    %v712 = vsub.f32 0.0, %v291
    %v713 = vsub.f32 0.0, %v292
    %v714 = vsub.f32 0.0, %v293
    %v715 = vsub.f32 0.0, %v294
    %v716 = vsub.f32 0.0, %v295
    %v717 = vsub.f32 0.0, %v296
    %v718 = vsub.f32 0.0, %v297
    %v719 = vsub.f32 0.0, %v298
    %v720 = vsub.f32 0.0, %v299
    %v721 = vsub.f32 0.0, %v300
    %v722 = vsub.f32 0.0, %v301
    %v723 = vsub.f32 0.0, %v302
    %v724 = vsub.f32 0.0, %v303
    %v725 = vsub.f32 0.0, %v304
    %v726 = vsub.f32 0.0, %v305
    %vm727 = vcmp.ne.f32.partialorder %v711, %v711
    %vm728 = vcmp.ne.f32.partialorder %v712, %v712
    %vm729 = vcmp.ne.f32.partialorder %v713, %v713
    %vm730 = vcmp.ne.f32.partialorder %v714, %v714
    %vm731 = vcmp.ne.f32.partialorder %v715, %v715
    %vm732 = vcmp.ne.f32.partialorder %v716, %v716
    %vm733 = vcmp.ne.f32.partialorder %v717, %v717
    %vm734 = vcmp.ne.f32.partialorder %v718, %v718
    %vm735 = vcmp.ne.f32.partialorder %v719, %v719
    %vm736 = vcmp.ne.f32.partialorder %v720, %v720
    %vm737 = vcmp.ne.f32.partialorder %v721, %v721
    %vm738 = vcmp.ne.f32.partialorder %v722, %v722
    %vm739 = vcmp.ne.f32.partialorder %v723, %v723
    %vm740 = vcmp.ne.f32.partialorder %v724, %v724
    %vm741 = vcmp.ne.f32.partialorder %v725, %v725
    %vm742 = vcmp.ne.f32.partialorder %v726, %v726
    %v743 = vadd.f32 %v290, 0.0
    %v744 = vadd.f32 %v291, 0.0
    %v745 = vadd.f32 %v292, 0.0
    %v746 = vadd.f32 %v293, 0.0
    %v747 = vadd.f32 %v294, 0.0
    %v748 = vadd.f32 %v295, 0.0
    %v749 = vadd.f32 %v296, 0.0
    %v750 = vadd.f32 %v297, 0.0
    %v751 = vadd.f32 %v298, 0.0
    %v752 = vadd.f32 %v299, 0.0
    %v753 = vadd.f32 %v300, 0.0
    %v754 = vadd.f32 %v301, 0.0
    %v755 = vadd.f32 %v302, 0.0
    %v756 = vadd.f32 %v303, 0.0
    %v757 = vadd.f32 %v304, 0.0
    %v758 = vadd.f32 %v305, 0.0
    %v759 = vand.u32 2147483647, %v711
    %v760 = vand.u32 2147483647, %v712
    %v761 = vand.u32 2147483647, %v713
    %v762 = vand.u32 2147483647, %v714
    %v763 = vand.u32 2147483647, %v715
    %v764 = vand.u32 2147483647, %v716
    %v765 = vand.u32 2147483647, %v717
    %v766 = vand.u32 2147483647, %v718
    %v767 = vand.u32 2147483647, %v719
    %v768 = vand.u32 2147483647, %v720
    %v769 = vand.u32 2147483647, %v721
    %v770 = vand.u32 2147483647, %v722
    %v771 = vand.u32 2147483647, %v723
    %v772 = vand.u32 2147483647, %v724
    %v773 = vand.u32 2147483647, %v725
    %v774 = vand.u32 2147483647, %v726
    %v775 = vsub.f32 0.0, %v759
    %v776 = vsub.f32 0.0, %v760
    %v777 = vsub.f32 0.0, %v761
    %v778 = vsub.f32 0.0, %v762
    %v779 = vsub.f32 0.0, %v763
    %v780 = vsub.f32 0.0, %v764
    %v781 = vsub.f32 0.0, %v765
    %v782 = vsub.f32 0.0, %v766
    %v783 = vsub.f32 0.0, %v767
    %v784 = vsub.f32 0.0, %v768
    %v785 = vsub.f32 0.0, %v769
    %v786 = vsub.f32 0.0, %v770
    %v787 = vsub.f32 0.0, %v771
    %v788 = vsub.f32 0.0, %v772
    %v789 = vsub.f32 0.0, %v773
    %v790 = vsub.f32 0.0, %v774
    %v791 = vmul.f32 %v775, 1.442695
    %v792 = vpow.pop %v791
    %v793 = vmul.f32 %v776, 1.442695
    %v794 = vpow.pop %v793
    %v795 = vmul.f32 %v777, 1.442695
    %v796 = vpow.pop %v795
    %v797 = vmul.f32 %v778, 1.442695
    %v798 = vpow.pop %v797
    %v799 = vmul.f32 %v779, 1.442695
    %v800 = vpow.pop %v799
    %v801 = vmul.f32 %v780, 1.442695
    %v802 = vpow.pop %v801
    %v803 = vmul.f32 %v781, 1.442695
    %v804 = vpow.pop %v803
    %v805 = vmul.f32 %v782, 1.442695
    %v806 = vpow.pop %v805
    %v807 = vmul.f32 %v783, 1.442695
    %v808 = vpow.pop %v807
    %v809 = vmul.f32 %v784, 1.442695
    %v810 = vpow.pop %v809
    %v811 = vmul.f32 %v785, 1.442695
    %v812 = vpow.pop %v811
    %v813 = vmul.f32 %v786, 1.442695
    %v814 = vpow.pop %v813
    %v815 = vmul.f32 %v787, 1.442695
    %v816 = vpow.pop %v815
    %v817 = vmul.f32 %v788, 1.442695
    %v818 = vpow.pop %v817
    %v819 = vmul.f32 %v789, 1.442695
    %v820 = vpow.pop %v819
    %v821 = vmul.f32 %v790, 1.442695
    %v822 = vpow.pop %v821
    %v823 = vadd.f32 %v792, 1.0
    %v824 = vlog2.pop %v823
    %v825 = vmul.f32 %v824, 0.6931472
    %v826 = vmul.f32 -0.5, %v792
    %v827 = vadd.f32 %v826, 1.0
    %v828 = vmul.f32 %v827, %v792
    %v829 = vand.u32 2147483647, %v792
    %vm830 = vcmp.lt.f32.partialorder %v829, 0.0004427343
    %v831 = vsel %vm830, %v828, %v825
    %v832 = vadd.f32 %v794, 1.0
    %v833 = vlog2.pop %v832
    %v834 = vmul.f32 %v833, 0.6931472
    %v835 = vmul.f32 -0.5, %v794
    %v836 = vadd.f32 %v835, 1.0
    %v837 = vmul.f32 %v836, %v794
    %v838 = vand.u32 2147483647, %v794
    %vm839 = vcmp.lt.f32.partialorder %v838, 0.0004427343
    %v840 = vsel %vm839, %v837, %v834
    %v841 = vadd.f32 %v796, 1.0
    %v842 = vlog2.pop %v841
    %v843 = vmul.f32 %v842, 0.6931472
    %v844 = vmul.f32 -0.5, %v796
    %v845 = vadd.f32 %v844, 1.0
    %v846 = vmul.f32 %v845, %v796
    %v847 = vand.u32 2147483647, %v796
    %vm848 = vcmp.lt.f32.partialorder %v847, 0.0004427343
    %v849 = vsel %vm848, %v846, %v843
    %v850 = vadd.f32 %v798, 1.0
    %v851 = vlog2.pop %v850
    %v852 = vmul.f32 %v851, 0.6931472
    %v853 = vmul.f32 -0.5, %v798
    %v854 = vadd.f32 %v853, 1.0
    %v855 = vmul.f32 %v854, %v798
    %v856 = vand.u32 2147483647, %v798
    %vm857 = vcmp.lt.f32.partialorder %v856, 0.0004427343
    %v858 = vsel %vm857, %v855, %v852
    %v859 = vadd.f32 %v800, 1.0
    %v860 = vlog2.pop %v859
    %v861 = vmul.f32 %v860, 0.6931472
    %v862 = vmul.f32 -0.5, %v800
    %v863 = vadd.f32 %v862, 1.0
    %v864 = vmul.f32 %v863, %v800
    %v865 = vand.u32 2147483647, %v800
    %vm866 = vcmp.lt.f32.partialorder %v865, 0.0004427343
    %v867 = vsel %vm866, %v864, %v861
    %v868 = vadd.f32 %v802, 1.0
    %v869 = vlog2.pop %v868
    %v870 = vmul.f32 %v869, 0.6931472
    %v871 = vmul.f32 -0.5, %v802
    %v872 = vadd.f32 %v871, 1.0
    %v873 = vmul.f32 %v872, %v802
    %v874 = vand.u32 2147483647, %v802
    %vm875 = vcmp.lt.f32.partialorder %v874, 0.0004427343
    %v876 = vsel %vm875, %v873, %v870
    %v877 = vadd.f32 %v804, 1.0
    %v878 = vlog2.pop %v877
    %v879 = vmul.f32 %v878, 0.6931472
    %v880 = vmul.f32 -0.5, %v804
    %v881 = vadd.f32 %v880, 1.0
    %v882 = vmul.f32 %v881, %v804
    %v883 = vand.u32 2147483647, %v804
    %vm884 = vcmp.lt.f32.partialorder %v883, 0.0004427343
    %v885 = vsel %vm884, %v882, %v879
    %v886 = vadd.f32 %v806, 1.0
    %v887 = vlog2.pop %v886
    %v888 = vmul.f32 %v887, 0.6931472
    %v889 = vmul.f32 -0.5, %v806
    %v890 = vadd.f32 %v889, 1.0
    %v891 = vmul.f32 %v890, %v806
    %v892 = vand.u32 2147483647, %v806
    %vm893 = vcmp.lt.f32.partialorder %v892, 0.0004427343
    %v894 = vsel %vm893, %v891, %v888
    %v895 = vadd.f32 %v808, 1.0
    %v896 = vlog2.pop %v895
    %v897 = vmul.f32 %v896, 0.6931472
    %v898 = vmul.f32 -0.5, %v808
    %v899 = vadd.f32 %v898, 1.0
    %v900 = vmul.f32 %v899, %v808
    %v901 = vand.u32 2147483647, %v808
    %vm902 = vcmp.lt.f32.partialorder %v901, 0.0004427343
    %v903 = vsel %vm902, %v900, %v897
    %v904 = vadd.f32 %v810, 1.0
    %v905 = vlog2.pop %v904
    %v906 = vmul.f32 %v905, 0.6931472
    %v907 = vmul.f32 -0.5, %v810
    %v908 = vadd.f32 %v907, 1.0
    %v909 = vmul.f32 %v908, %v810
    %v910 = vand.u32 2147483647, %v810
    %vm911 = vcmp.lt.f32.partialorder %v910, 0.0004427343
    %v912 = vsel %vm911, %v909, %v906
    %v913 = vadd.f32 %v812, 1.0
    %v914 = vlog2.pop %v913
    %v915 = vmul.f32 %v914, 0.6931472
    %v916 = vmul.f32 -0.5, %v812
    %v917 = vadd.f32 %v916, 1.0
    %v918 = vmul.f32 %v917, %v812
    %v919 = vand.u32 2147483647, %v812
    %vm920 = vcmp.lt.f32.partialorder %v919, 0.0004427343
    %v921 = vsel %vm920, %v918, %v915
    %v922 = vadd.f32 %v814, 1.0
    %v923 = vlog2.pop %v922
    %v924 = vmul.f32 %v923, 0.6931472
    %v925 = vmul.f32 -0.5, %v814
    %v926 = vadd.f32 %v925, 1.0
    %v927 = vmul.f32 %v926, %v814
    %v928 = vand.u32 2147483647, %v814
    %vm929 = vcmp.lt.f32.partialorder %v928, 0.0004427343
    %v930 = vsel %vm929, %v927, %v924
    %v931 = vadd.f32 %v816, 1.0
    %v932 = vlog2.pop %v931
    %v933 = vmul.f32 %v932, 0.6931472
    %v934 = vmul.f32 -0.5, %v816
    %v935 = vadd.f32 %v934, 1.0
    %v936 = vmul.f32 %v935, %v816
    %v937 = vand.u32 2147483647, %v816
    %vm938 = vcmp.lt.f32.partialorder %v937, 0.0004427343
    %v939 = vsel %vm938, %v936, %v933
    %v940 = vadd.f32 %v818, 1.0
    %v941 = vlog2.pop %v940
    %v942 = vmul.f32 %v941, 0.6931472
    %v943 = vmul.f32 -0.5, %v818
    %v944 = vadd.f32 %v943, 1.0
    %v945 = vmul.f32 %v944, %v818
    %v946 = vand.u32 2147483647, %v818
    %vm947 = vcmp.lt.f32.partialorder %v946, 0.0004427343
    %v948 = vsel %vm947, %v945, %v942
    %v949 = vadd.f32 %v820, 1.0
    %v950 = vlog2.pop %v949
    %v951 = vmul.f32 %v950, 0.6931472
    %v952 = vmul.f32 -0.5, %v820
    %v953 = vadd.f32 %v952, 1.0
    %v954 = vmul.f32 %v953, %v820
    %v955 = vand.u32 2147483647, %v820
    %vm956 = vcmp.lt.f32.partialorder %v955, 0.0004427343
    %v957 = vsel %vm956, %v954, %v951
    %v958 = vadd.f32 %v822, 1.0
    %v959 = vlog2.pop %v958
    %v960 = vmul.f32 %v959, 0.6931472
    %v961 = vmul.f32 -0.5, %v822
    %v962 = vadd.f32 %v961, 1.0
    %v963 = vmul.f32 %v962, %v822
    %v964 = vand.u32 2147483647, %v822
    %vm965 = vcmp.lt.f32.partialorder %v964, 0.0004427343
    %v966 = vsel %vm965, %v963, %v960
    %v967 = vadd.f32 %v695, %v831
    %v968 = vadd.f32 %v696, %v840
    %v969 = vadd.f32 %v697, %v849
    %v970 = vadd.f32 %v698, %v858
    %v971 = vadd.f32 %v699, %v867
    %v972 = vadd.f32 %v700, %v876
    %v973 = vadd.f32 %v701, %v885
    %v974 = vadd.f32 %v702, %v894
    %v975 = vadd.f32 %v703, %v903
    %v976 = vadd.f32 %v704, %v912
    %v977 = vadd.f32 %v705, %v921
    %v978 = vadd.f32 %v706, %v930
    %v979 = vadd.f32 %v707, %v939
    %v980 = vadd.f32 %v708, %v948
    %v981 = vadd.f32 %v709, %v957
    %v982 = vadd.f32 %v710, %v966
    %v983 = vsel %vm727, %v743, %v967
    %v984 = vsel %vm728, %v744, %v968
    %v985 = vsel %vm729, %v745, %v969
    %v986 = vsel %vm730, %v746, %v970
    %v987 = vsel %vm731, %v747, %v971
    %v988 = vsel %vm732, %v748, %v972
    %v989 = vsel %vm733, %v749, %v973
    %v990 = vsel %vm734, %v750, %v974
    %v991 = vsel %vm735, %v751, %v975
    %v992 = vsel %vm736, %v752, %v976
    %v993 = vsel %vm737, %v753, %v977
    %v994 = vsel %vm738, %v754, %v978
    %v995 = vsel %vm739, %v755, %v979
    %v996 = vsel %vm740, %v756, %v980
    %v997 = vsel %vm741, %v757, %v981
    %v998 = vsel %vm742, %v758, %v982
    %v999 = vadd.f32 %v679, %v983
    %v1000 = vadd.f32 %v680, %v984
    %v1001 = vadd.f32 %v681, %v985
    %v1002 = vadd.f32 %v682, %v986
    %v1003 = vadd.f32 %v683, %v987
    %v1004 = vadd.f32 %v684, %v988
    %v1005 = vadd.f32 %v685, %v989
    %v1006 = vadd.f32 %v686, %v990
    %v1007 = vadd.f32 %v687, %v991
    %v1008 = vadd.f32 %v688, %v992
    %v1009 = vadd.f32 %v689, %v993
    %v1010 = vadd.f32 %v690, %v994
    %v1011 = vadd.f32 %v691, %v995
    %v1012 = vadd.f32 %v692, %v996
    %v1013 = vadd.f32 %v693, %v997
    %v1014 = vadd.f32 %v694, %v998
    %v1015 = vsel %vm258, %v999, 0.0
    %v1016 = vsel %vm259, %v1000, 0.0
    %v1017 = vsel %vm260, %v1001, 0.0
    %v1018 = vsel %vm261, %v1002, 0.0
    %v1019 = vsel %vm262, %v1003, 0.0
    %v1020 = vsel %vm263, %v1004, 0.0
    %v1021 = vsel %vm264, %v1005, 0.0
    %v1022 = vsel %vm265, %v1006, 0.0
    %v1023 = vsel %vm266, %v1007, 0.0
    %v1024 = vsel %vm267, %v1008, 0.0
    %v1025 = vsel %vm268, %v1009, 0.0
    %v1026 = vsel %vm269, %v1010, 0.0
    %v1027 = vsel %vm270, %v1011, 0.0
    %v1028 = vsel %vm271, %v1012, 0.0
    %v1029 = vsel %vm272, %v1013, 0.0
    %v1030 = vsel %vm273, %v1014, 0.0
    %vm1031 = vcmask 7168
    %v1032 = vsel %vm1031, %v1015, 0.0
    %v1033 = vsel %vm1031, %v1016, 0.0
    %v1034 = vadd.f32 %v1032, %v1033
    %v1035 = vsel %vm1031, %v1017, 0.0
    %v1036 = vadd.f32 %v1034, %v1035
    %v1037 = vsel %vm1031, %v1018, 0.0
    %v1038 = vadd.f32 %v1036, %v1037
    %v1039 = vsel %vm1031, %v1019, 0.0
    %v1040 = vadd.f32 %v1038, %v1039
    %v1041 = vsel %vm1031, %v1020, 0.0
    %v1042 = vadd.f32 %v1040, %v1041
    %v1043 = vsel %vm1031, %v1021, 0.0
    %v1044 = vadd.f32 %v1042, %v1043
    %v1045 = vsel %vm1031, %v1022, 0.0
    %v1046 = vadd.f32 %v1044, %v1045
    %v1047 = vsel %vm1031, %v1023, 0.0
    %v1048 = vadd.f32 %v1046, %v1047
    %v1049 = vsel %vm1031, %v1024, 0.0
    %v1050 = vadd.f32 %v1048, %v1049
    %v1051 = vsel %vm1031, %v1025, 0.0
    %v1052 = vadd.f32 %v1050, %v1051
    %v1053 = vsel %vm1031, %v1026, 0.0
    %v1054 = vadd.f32 %v1052, %v1053
    %v1055 = vsel %vm1031, %v1027, 0.0
    %v1056 = vadd.f32 %v1054, %v1055
    %v1057 = vsel %vm1031, %v1028, 0.0
    %v1058 = vadd.f32 %v1056, %v1057
    %v1059 = vsel %vm1031, %v1029, 0.0
    %v1060 = vadd.f32 %v1058, %v1059
    %v1061 = vsel %vm1031, %v1030, 0.0
    %v1062 = vadd.f32 %v1060, %v1061
    %1063 = vadd.xlane.f32.xlu0 %v1062
    %v1064 = vpop.xlane.xlu0 %1063
    %v1065 = vrot.slane %v1064, 4
    %v1066 = vadd.f32 %v1064, %v1065
    %v1067 = vrot.slane %v1066, 2
    %v1068 = vadd.f32 %v1066, %v1067
    %v1069 = vrot.slane %v1068, 1
    %v1070 = vadd.f32 %v1068, %v1069
    %s1071 = vtos %v1070
    %v1072 = vstv %s1071
    %1073 = vst [vmem:[#allocation8] sm:$0xff] %v1072
    // Predicated region
    $region22: #{tpu_custom_call.1} parent=1 // pred_check
      _
    $region23: #{tpu_custom_call.1} parent=1 // pred_check_branch
      %1075 = sbr.rel (0) target = $region25
    $region24: #{tpu_custom_call.1} parent=1 // pred_region
      %s1077 = ssub.s32 32, 32
      %1078 = vsyncadd [#allocation4], %s1077
      %s1080 = sshll.u32 [#allocation7], 4
      %s1081 = int_to_ptr.vmem [resolvable:$true] %s1080
      %1083 = dma.vmem_to_hbm [thread:$0]  %s1081, 32, %s3, [#allocation4]
    $region25: #{tpu_custom_call.1} parent=1 // pred_fallthru
      _
    // Predicated region
    $region26: #{tpu_custom_call.1} parent=1 // pred_check
      _
    $region27: #{tpu_custom_call.1} parent=1 // pred_check_branch
      %1085 = sbr.rel (0) target = $region29
    $region28: #{tpu_custom_call.1} parent=1 // pred_region
      %s1087 = ssub.s32 128, 128
      %1088 = vsyncadd [#allocation9], %s1087
      %s1090 = sshll.u32 [#allocation8], 4
      %s1091 = int_to_ptr.vmem [resolvable:$true] %s1090
      %1093 = dma.vmem_to_hbm [thread:$0]  %s1091, 128, %s4, [#allocation9]
    $region29: #{tpu_custom_call.1} parent=1 // pred_fallthru
      _
    // Predicated region
    $region30: #{tpu_custom_call.1} parent=1 // pred_check
      _
    $region31: #{tpu_custom_call.1} parent=1 // pred_check_branch
      %1095 = sbr.rel (0) target = $region33
    $region32: #{tpu_custom_call.1} parent=1 // pred_region
      %1096 = dma.done [#allocation4], 32
    $region33: #{tpu_custom_call.1} parent=1 // pred_fallthru
      _
    // Predicated region
    $region34: #{tpu_custom_call.1} parent=1 // pred_check
      _
    $region35: #{tpu_custom_call.1} parent=1 // pred_check_branch
      %1098 = sbr.rel (0) target = $region37
    $region36: #{tpu_custom_call.1} parent=1 // pred_region
      %1099 = dma.done [#allocation9], 128
    $region37: #{tpu_custom_call.1} parent=1 // pred_fallthru
      _
    %1100 = vsyncpa [#allocation3], 1
    %1101 = vsyncpa [#allocation6], 1
    %1102 = vsyncpa [#allocation4], 1
    %1103 = vsyncpa [#allocation9], 1

</llo_original>
